<compile_context>
chip_gen: v6e
topology: v6e:2x2x1
jax: 0.10.0
libtpu: 0.0.40
codegen_flags: <defaults>
</compile_context>

<pallas_src>
import math

import numpy as np
import jax
import jax.numpy as jnp
from jax.experimental import pallas as pl
from jax.experimental.pallas import tpu as pltpu


def _init_total_flops(k_size, out_size, g_size, in_csize, out_csize):
    total_flops = 0.0
    for i in range(len(k_size)):
        total_flops += (k_size[i] * (in_csize[i] / g_size[i]) * out_csize[i] * out_size[i]
                        + 3.0 * out_csize[i] * out_size[i])
    return total_flops


def make_flops_constraint_resnet_loss(*, p, k_size, out_size, g_size, in_csize,
                                      out_csize, structure, weight=2.0):
    """Build a cached, jitted loss fn equivalent to Flops_constraint_resnet
    (HN=True, loss_type='log') forward."""
    n = int(sum(structure))
    t_flops = _init_total_flops(k_size, out_size, g_size, in_csize, out_csize)

    # Per-segment coefficient a_i (multiplies c_out_i) and the constant term,
    # both pre-scaled by 1/total_flops so the kernel works with O(1) values.
    w_elem = np.zeros((n,), np.float32)
    const_flops = 0.0
    start = 0
    for i, seg in enumerate(structure):
        a_i = (k_size[2 * i] * (in_csize[2 * i] / g_size[2 * i]) * out_size[2 * i]
               + 3.0 * out_size[2 * i]
               + k_size[2 * i + 1] * (1.0 / g_size[2 * i + 1]) * out_csize[2 * i + 1]
               * out_size[2 * i + 1])
        const_flops += 3.0 * out_csize[2 * i + 1] * out_size[2 * i + 1]
        w_elem[start:start + seg] = a_i / t_flops
        start += seg
    c_prime = float(const_flops / t_flops)

    # Pad coefficient vector once to an (R, 128) tile with R a multiple of 8.
    tile = 8 * 128
    padded = ((n + tile - 1) // tile) * tile
    rows = padded // 128
    w_np = np.zeros((padded,), np.float32)
    w_np[:n] = w_elem
    w_pad = jax.device_put(w_np.reshape(rows, 128))   # cached device array

    # Scalar constants baked into the kernel (fold at Mosaic compile time).
    p_f = float(p)
    p_hi = float(p + 0.005)
    p_lo = float(p - 0.005)
    log_p = float(math.log(p_f))
    weight_f = float(weight)

    def _flops_loss_kernel(x_ref, w_ref, out_ref):
        # x_ref, w_ref: (rows, 128) f32 VMEM tiles (padded gate / coefficients)
        # out_ref     : SMEM (1,) f32 scalar loss
        ratio = jnp.sum(x_ref[...] * w_ref[...]) + c_prime
        # 'log' loss, single-log reformulation (identical to the two-branch form):
        #   ratio > p : log(max(ratio, p+0.005) / p)  =  log(clamped) - log(p) > 0
        #   else      : log(p / min(ratio, p-0.005))  =  log(p) - log(clamped) > 0
        clamped = jnp.where(ratio > p_f,
                            jnp.maximum(ratio, p_hi),
                            jnp.minimum(ratio, p_lo))
        out_ref[0] = weight_f * jnp.abs(jnp.log(clamped) - log_p)

    call = pl.pallas_call(
        _flops_loss_kernel,
        out_shape=jax.ShapeDtypeStruct((1,), jnp.float32),
        in_specs=[
            pl.BlockSpec(memory_space=pltpu.MemorySpace.VMEM),
            pl.BlockSpec(memory_space=pltpu.MemorySpace.VMEM),
        ],
        out_specs=pl.BlockSpec(memory_space=pltpu.MemorySpace.SMEM),
    )

    @jax.jit
    def loss_fn(x):
        x = jnp.asarray(x, jnp.float32).reshape(-1)   # .squeeze() equivalent
        x_pad = jnp.pad(x, (0, padded - n)).reshape(rows, 128)
        return call(x_pad, w_pad)[0]

    return loss_fn


def _reference_loss(x, *, p, k_size, out_size, g_size, in_csize, out_csize,
                    structure, weight=2.0):
    """Pure-numpy port of the PyTorch forward (HN=True, 'log') for validation."""
    x = np.asarray(x, np.float64).reshape(-1)
    t_flops = _init_total_flops(k_size, out_size, g_size, in_csize, out_csize)
    sum_flops = 0.0
    start = 0
    for i, seg in enumerate(structure):
        c_out = float(x[start:start + seg].sum())
        start += seg
        sum_flops += (k_size[2 * i] * (in_csize[2 * i] / g_size[2 * i]) * c_out
                      * out_size[2 * i] + 3.0 * c_out * out_size[2 * i])
        sum_flops += (k_size[2 * i + 1] * (c_out / g_size[2 * i + 1])
                      * out_csize[2 * i + 1] * out_size[2 * i + 1]
                      + 3.0 * out_csize[2 * i + 1] * out_size[2 * i + 1])
    ratio = sum_flops / t_flops
    if ratio > p:
        loss = np.log(max(ratio, p + 0.005) / p)
    else:
        loss = np.log(p / min(ratio, p - 0.005))
    return weight * loss


if __name__ == "__main__":
    # Deterministic synthetic configuration (small ResNet-like block description).
    # structure: channels per prunable block; k_size/out_size/g_size/in_csize/out_csize
    # have length 2 * len(structure) (two convs per residual block).
    structure = [4, 8, 4]
    n_layers = 2 * len(structure)
    k_size   = [9, 9, 9, 9, 9, 9]            # 3x3 convs
    out_size = [16 * 16] * n_layers          # output spatial elements
    g_size   = [1] * n_layers                # no grouping
    in_csize = [4, 4, 8, 8, 4, 4]
    out_csize = [4, 8, 8, 4, 4, 8]
    p = 0.5
    weight = 2.0

    key = jax.random.PRNGKey(0)
    x = jax.random.uniform(key, (sum(structure),), jnp.float32)  # gate probabilities

    loss_fn = make_flops_constraint_resnet_loss(
        p=p, k_size=k_size, out_size=out_size, g_size=g_size,
        in_csize=in_csize, out_csize=out_csize, structure=structure, weight=weight)

    loss = jax.block_until_ready(loss_fn(x))
    # Second call exercises the cached/jitted fast path (no retrace, no re-upload).
    loss2 = jax.block_until_ready(loss_fn(x))

    ref = _reference_loss(
        np.asarray(x), p=p, k_size=k_size, out_size=out_size, g_size=g_size,
        in_csize=in_csize, out_csize=out_csize, structure=structure, weight=weight)
    assert np.allclose(float(loss), ref, rtol=1e-4, atol=1e-5), (float(loss), ref)
    assert np.allclose(float(loss2), ref, rtol=1e-4, atol=1e-5), (float(loss2), ref)

    print("KERNEL_OK")
</pallas_src>

<mosaic_0001>
module attributes {stable_mosaic.version = 11 : i64} {
  func.func @_flops_loss_kernel(%arg0: memref<8x128xf32, #tpu.memory_space<vmem>>, %arg1: memref<8x128xf32, #tpu.memory_space<vmem>>, %arg2: memref<1xf32, #tpu.memory_space<smem>>) attributes {dimension_semantics = [], scalar_prefetch = 0 : i64, scratch_operands = 0 : i64, tpu.core_type = #tpu.core_type<tc>} {
    %c0 = arith.constant 0 : index
    %c0_0 = arith.constant 0 : index
    %0 = vector.load %arg0[%c0, %c0_0] : memref<8x128xf32, #tpu.memory_space<vmem>>, vector<8x128xf32>
    %c0_1 = arith.constant 0 : index
    %c0_2 = arith.constant 0 : index
    %1 = vector.load %arg1[%c0_1, %c0_2] : memref<8x128xf32, #tpu.memory_space<vmem>>, vector<8x128xf32>
    %2 = arith.mulf %0, %1 : vector<8x128xf32>
    %3 = vector.shape_cast %2 : vector<8x128xf32> to vector<1x8x128xf32>
    %cst = arith.constant dense<0.000000e+00> : vector<1xf32>
    %4 = vector.multi_reduction <add>, %3, %cst [1, 2] : vector<1x8x128xf32> to vector<1xf32>
    %5 = vector.shape_cast %4 : vector<1xf32> to vector<1x1x1xf32>
    %6 = vector.extract %5[0, 0, 0] : f32 from vector<1x1x1xf32>
    %cst_3 = arith.constant 0.0326797403 : f32
    %7 = arith.addf %6, %cst_3 : f32
    %cst_4 = arith.constant 5.000000e-01 : f32
    %8 = arith.cmpf ogt, %7, %cst_4 : f32
    %cst_5 = arith.constant 5.050000e-01 : f32
    %9 = arith.maximumf %7, %cst_5 : f32
    %cst_6 = arith.constant 4.950000e-01 : f32
    %10 = arith.minimumf %7, %cst_6 : f32
    %11 = arith.select %8, %9, %10 : f32
    %12 = math.log %11 : f32
    %cst_7 = arith.constant -0.693147182 : f32
    %13 = arith.subf %12, %cst_7 : f32
    %14 = math.absf %13 : f32
    %cst_8 = arith.constant 2.000000e+00 : f32
    %15 = arith.mulf %cst_8, %14 : f32
    %c0_9 = arith.constant 0 : index
    %16 = memref.load %arg2[%c0_9] : memref<1xf32, #tpu.memory_space<smem>>
    memref.store %15, %arg2[%c0_9] : memref<1xf32, #tpu.memory_space<smem>>
    return
  }
}

</mosaic_0001>

<llo_original>
// kernel: loss_fn.1
$region0: #{loss_fn.1}
  #allocation0 [shape = 'u32[]', space=smem, size = 0x4, offset = 0x4, fixed_abs, tag = 'smem constant byte address 0x4 - core index']
  #allocation1 [shape = 'u32[144,128]{1,0:T(1,128)}', space=vmem, size = 0x12000, scoped, tag = 'internal scratch']
  %s0 = inlined_call_operand.vmem [shape: f32[8,128], index: 0, kind: input, shape index: {}]
  %s1 = inlined_call_operand.vmem [shape: f32[8,128], index: 1, kind: input, shape index: {}]
  %s2 = inlined_call_operand.hbm [shape: f32[1], index: 2, kind: output, shape index: {}]
  %s3 = sld [smem:[#allocation0]]
  $region18: #{loss_fn.1} parent=0
    _
  %s5 = ssub.s32 1, %s3
  %s6 = scalar_select 0, %s5, %s3
  $region1: #{loss_fn.1} parent=0
    #allocation2 [shape = 'u8[512]{0}', space=smem, size = 0x200, scoped, tag = 'output window, operand 0, single buffered']
    #allocation3 [shape = 's32[1]{0}', space=sflag, size = 0x4, scoped, tag = 'scoped memory for loss_fn.1']
    %7 = vsyncpa [#allocation3], 0
    // Predicated region
    $region2: #{loss_fn.1} parent=1 // pred_check
      _
    $region3: #{loss_fn.1} parent=1 // pred_check_branch
      %9 = sbr.rel (0) target = $region5
    $region4: #{loss_fn.1} parent=1 // pred_region
      _
    $region5: #{loss_fn.1} parent=1 // pred_fallthru
      _
    // Predicated region
    $region6: #{loss_fn.1} parent=1 // pred_check
      _
    $region7: #{loss_fn.1} parent=1 // pred_check_branch
      %11 = sbr.rel (0) target = $region9
    $region8: #{loss_fn.1} parent=1 // pred_region
      _
    $region9: #{loss_fn.1} parent=1 // pred_fallthru
      _
    %v12 = vld [vmem:[%s0] sm:$0xff]
    %v13 = vld [vmem:[%s1] sm:$0xff]
    %v14 = vmul.f32 %v12, %v13
    %15 = vadd.xlane.f32.xlu0 %v14
    %v16 = vpop.xlane.xlu0 %15
    %v17 = vrot.slane %v16, 4
    %v18 = vadd.f32 %v16, %v17
    %v19 = vrot.slane %v18, 2
    %v20 = vadd.f32 %v18, %v19
    %v21 = vrot.slane %v20, 1
    %v22 = vadd.f32 %v20, %v21
    %s23 = vtos %v22
    %s24 = sadd.f32 %s23, 0.03267974
    %p25 = scmp.gt.f32.partialorder %s24, 0.5
    %s26 = smax.f32 %s24, 0.505
    %s27 = smin.f32 %s24, 0.495
    %s28 = scalar_select %p25, %s26, %s27
    %v29 = vstv %s28
    %v30 = vlog2.pop %v29
    %v31 = vmul.f32 %v30, 0.6931472
    %s32 = vtos %v31
    %s33 = ssub.f32 %s32, -0.6931472
    %s34 = sand.u32 2147483647, %s33
    %s35 = smul.f32 %s34, 2.0
    %s36 = scalar_lea.smem [#allocation2], 0
    %37 = sst [smem:[%s36]] %s35
    // Predicated region
    $region10: #{loss_fn.1} parent=1 // pred_check
      _
    $region11: #{loss_fn.1} parent=1 // pred_check_branch
      %39 = sbr.rel (0) target = $region13
    $region12: #{loss_fn.1} parent=1 // pred_region
      %s41 = ssub.s32 16, 16
      %42 = vsyncadd [#allocation3], %s41
      %45 = dma.smem_to_hbm [#allocation2], 16, %s2, [#allocation3]
    $region13: #{loss_fn.1} parent=1 // pred_fallthru
      _
    // Predicated region
    $region14: #{loss_fn.1} parent=1 // pred_check
      _
    $region15: #{loss_fn.1} parent=1 // pred_check_branch
      %47 = sbr.rel (0) target = $region17
    $region16: #{loss_fn.1} parent=1 // pred_region
      %48 = dma.done [#allocation3], 16
    $region17: #{loss_fn.1} parent=1 // pred_fallthru
      _
    %49 = sfence
    %50 = vsyncpa [#allocation3], 1

</llo_original>
